<compile_context>
chip_gen: v7x
topology: tpu7x:2x2x1
jax: 0.10.0
libtpu: 0.0.40
codegen_flags: <defaults>
</compile_context>

<pallas_src>
import jax
import jax.numpy as jnp
from jax import lax
from jax.experimental import pallas as pl
from jax.experimental.pallas import tpu as pltpu


def _round_up(a: int, m: int) -> int:
    return ((a + m - 1) // m) * m


def relu_model_kernel(x_ref, w_ref, b_ref, o_ref):
    """One batch tile: o = ReLU((x @ W.T) @ W + b), f32 accumulation/epilogue."""
    w = w_ref[...]                          # (H, D)  f32 or bf16
    cdt = w.dtype                           # MXU operand dtype
    x = x_ref[...].astype(cdt)              # (TB, D)

    # Down-projection x @ W.T: contract the D axis directly (no XLU transpose).
    x_prime = lax.dot_general(
        x, w, (((1,), (1,)), ((), ())),
        preferred_element_type=jnp.float32)           # (TB, H) f32

    # Tied up-projection, f32 accumulation on the MXU.
    y = jnp.dot(x_prime.astype(cdt), w,
                preferred_element_type=jnp.float32)   # (TB, D) f32

    # Bias add + ReLU on the VPU in f32 (safe on v5e: no bf16 VPU there).
    y = y + b_ref[...].astype(jnp.float32)
    o_ref[...] = jnp.maximum(y, 0.0).astype(o_ref.dtype)


def _vmem_capacity_bytes() -> int:
    try:
        return int(pltpu.get_tpu_info().vmem_capacity_bytes)
    except Exception:
        return 64 * 1024 * 1024       # conservative: v7x per-TensorCore VMEM


def relu_model_forward(x, w, bias, *, tb=None, use_bf16_matmul=False):
    """y = ReLU((x @ W.T) @ W + bias).  x: (B, D), W: (H, D), bias: (D,)."""
    B, D = x.shape
    H, D2 = w.shape
    assert D == D2, "weight last dim must match input dim"
    assert bias.shape == (D,)

    w_in = w.astype(jnp.bfloat16) if use_bf16_matmul else w
    b_in = bias.reshape(1, D)

    # ---- VMEM footprint model (rows pad to 8 sublanes / 128 lanes in VMEM) ----
    D_lanes = _round_up(D, 128)
    H_lanes = _round_up(H, 128)
    H_sub = _round_up(H, 8)
    x_item = x.dtype.itemsize
    w_item = w_in.dtype.itemsize

    cap = _vmem_capacity_bytes()
    usable = max(cap - (16 << 20), 16 << 20)     # headroom for compiler scratch

    w_bytes = 2 * H_sub * D_lanes * w_item       # assume 2 buffers (conservative)
    bias_bytes = 2 * 8 * D_lanes * 4
    fixed = w_bytes + bias_bytes + (2 << 20)

    # Resident-W design requires W (+ headroom) to fit in per-core VMEM.
    # TODO(synk): D-tiled reduction grid for W too large to stay resident.
    assert fixed < usable, (
        f"weight footprint {w_bytes / 2**20:.1f} MiB too large for resident-W kernel")

    # ---- Pick the largest batch tile that fits the VMEM budget ----
    tb_max = _round_up(B, 8)
    if tb is None:
        tb = 8
        for cand in (1024, 512, 256, 128, 64, 32, 16, 8):
            t = min(cand, tb_max)
            io = 4 * t * D_lanes * x_item        # x + out tiles, double-buffered
            xprime = t * H_lanes * 4             # f32 intermediate
            if fixed + io + xprime <= usable:
                tb = t
                break
    tb = min(_round_up(tb, 8), tb_max)

    grid = (pl.cdiv(B, tb),)
    cost = pl.CostEstimate(
        flops=4 * B * H * D,                     # two (B,D)x(H,D) matmuls
        transcendentals=0,
        bytes_accessed=2 * B * D * x_item + H * D * w_item + D * 4)

    def build(single_buffer_consts: bool):
        const_kw = {}
        if single_buffer_consts:
            # W / bias are revisited every grid step: one VMEM buffer suffices.
            const_kw = dict(pipeline_mode=pl.Buffered(1))
        return pl.pallas_call(
            relu_model_kernel,
            out_shape=jax.ShapeDtypeStruct((B, D), x.dtype),
            grid=grid,
            in_specs=[
                pl.BlockSpec((tb, D), lambda i: (i, 0)),             # x streams over B
                pl.BlockSpec((H, D), lambda i: (0, 0), **const_kw),  # W resident
                pl.BlockSpec((1, D), lambda i: (0, 0), **const_kw),  # bias resident
            ],
            out_specs=pl.BlockSpec((tb, D), lambda i: (i, 0)),
            compiler_params=pltpu.CompilerParams(
                dimension_semantics=("parallel",),
                vmem_limit_bytes=int(usable)),
            cost_estimate=cost,
        )

    try:
        return build(True)(x, w_in, b_in)
    except Exception:
        # Fallback if this Pallas version rejects Buffered(1) single-buffering.
        return build(False)(x, w_in, b_in)


if __name__ == "__main__":
    key = jax.random.PRNGKey(0)
    k_x, k_w, k_b = jax.random.split(key, 3)

    batch, dim, hidden_dim = 8, 32, 16

    # Deterministic parameter init (mimics nn.Linear default uniform range).
    bound = 1.0 / (dim ** 0.5)
    W = jax.random.uniform(k_w, (hidden_dim, dim), dtype=jnp.float32,
                           minval=-bound, maxval=bound)
    # Module inits bias to zeros; use a small nonzero bias to exercise the add.
    bias = 0.01 * jax.random.normal(k_b, (dim,), dtype=jnp.float32)

    x = jax.random.normal(k_x, (batch, dim), dtype=jnp.float32)

    out = relu_model_forward(x, W, bias)
    out = jax.block_until_ready(out)

    # Reference check in plain JAX (ReLUModel forward).
    ref = jnp.maximum((x @ W.T) @ W + bias, 0.0)
    assert out.shape == (batch, dim)
    assert jnp.allclose(out, ref, atol=1e-5, rtol=1e-5), "mismatch vs reference"

    print("KERNEL_OK")
</pallas_src>

<mosaic_0001>
module attributes {stable_mosaic.version = 11 : i64} {
  func.func @relu_model_kernel(%arg0: i32, %arg1: memref<8x32xf32, #tpu.memory_space<vmem>>, %arg2: memref<16x32xf32, #tpu.memory_space<vmem>>, %arg3: memref<1x32xf32, #tpu.memory_space<vmem>>, %arg4: memref<8x32xf32, #tpu.memory_space<vmem>>) attributes {dimension_semantics = [#tpu.dimension_semantics<parallel>], iteration_bounds = array<i64: 1>, scalar_prefetch = 0 : i64, scratch_operands = 0 : i64, tpu.core_type = #tpu.core_type<tc>, window_params = [{transform_indices = @transform_0, window_bounds = array<i64: 8, 32>}, {pipeline_mode = #tpu.pipeline_mode<synchronous>, transform_indices = @transform_1, window_bounds = array<i64: 16, 32>}, {pipeline_mode = #tpu.pipeline_mode<synchronous>, transform_indices = @transform_2, window_bounds = array<i64: 1, 32>}, {transform_indices = @transform_3, window_bounds = array<i64: 8, 32>}]} {
    %c0 = arith.constant 0 : index
    %c0_0 = arith.constant 0 : index
    %0 = vector.load %arg2[%c0, %c0_0] : memref<16x32xf32, #tpu.memory_space<vmem>>, vector<16x32xf32>
    %c0_1 = arith.constant 0 : index
    %c0_2 = arith.constant 0 : index
    %1 = vector.load %arg1[%c0_1, %c0_2] : memref<8x32xf32, #tpu.memory_space<vmem>>, vector<8x32xf32>
    %cst = arith.constant dense<0.000000e+00> : vector<8x16xf32>
    %2 = tpu.matmul %1, %0, %cst {dimension_numbers = #tpu.dot_dimension_numbers<[1], [1], [0], [0], [0, 0, 1, 0], [], []>} : vector<8x32xf32>, vector<16x32xf32>, vector<8x16xf32> -> vector<8x16xf32>
    %cst_3 = arith.constant dense<0.000000e+00> : vector<8x32xf32>
    %3 = tpu.matmul %2, %0, %cst_3 {dimension_numbers = #tpu.dot_dimension_numbers<[1], [0], [0], [1], [0, 0, 1, 1], [], []>} : vector<8x16xf32>, vector<16x32xf32>, vector<8x32xf32> -> vector<8x32xf32>
    %c0_4 = arith.constant 0 : index
    %c0_5 = arith.constant 0 : index
    %4 = vector.load %arg3[%c0_4, %c0_5] : memref<1x32xf32, #tpu.memory_space<vmem>>, vector<1x32xf32>
    %5 = vector.broadcast %4 : vector<1x32xf32> to vector<8x32xf32>
    %6 = arith.addf %3, %5 : vector<8x32xf32>
    %cst_6 = arith.constant 0.000000e+00 : f32
    %7 = vector.broadcast %cst_6 : f32 to vector<8x32xf32>
    %8 = arith.maximumf %6, %7 : vector<8x32xf32>
    %c0_7 = arith.constant 0 : index
    %c0_8 = arith.constant 0 : index
    %9 = vector.load %arg4[%c0_7, %c0_8] : memref<8x32xf32, #tpu.memory_space<vmem>>, vector<8x32xf32>
    tpu.vector_store %arg4[%c0_7, %c0_8], %8 {strides = array<i32>} : memref<8x32xf32, #tpu.memory_space<vmem>>, vector<8x32xf32>,
    return
  }
  func.func @transform_0(%arg0: i32) -> (i32, i32) {
    %c0_i32 = arith.constant 0 : i32
    %c0_i32_0 = arith.constant 0 : i32
    return %arg0, %c0_i32 : i32, i32
  }
  func.func @transform_1(%arg0: i32) -> (i32, i32) {
    %c0_i32 = arith.constant 0 : i32
    %c0_i32_0 = arith.constant 0 : i32
    %c0_i32_1 = arith.constant 0 : i32
    return %c0_i32, %c0_i32_0 : i32, i32
  }
  func.func @transform_2(%arg0: i32) -> (i32, i32) {
    %c0_i32 = arith.constant 0 : i32
    %c0_i32_0 = arith.constant 0 : i32
    %c0_i32_1 = arith.constant 0 : i32
    return %c0_i32, %c0_i32_0 : i32, i32
  }
  func.func @transform_3(%arg0: i32) -> (i32, i32) {
    %c0_i32 = arith.constant 0 : i32
    %c0_i32_0 = arith.constant 0 : i32
    return %arg0, %c0_i32 : i32, i32
  }
}

module attributes {stable_mosaic.version = 11 : i64} {
  func.func @relu_model_kernel(%arg0: i32, %arg1: memref<8x32xf32, #tpu.memory_space<vmem>>, %arg2: memref<16x32xf32, #tpu.memory_space<vmem>>, %arg3: memref<1x32xf32, #tpu.memory_space<vmem>>, %arg4: memref<8x32xf32, #tpu.memory_space<vmem>>) attributes {dimension_semantics = [#tpu.dimension_semantics<parallel>], iteration_bounds = array<i64: 1>, scalar_prefetch = 0 : i64, scratch_operands = 0 : i64, tpu.core_type = #tpu.core_type<tc>, window_params = [{transform_indices = @transform_0, window_bounds = array<i64: 8, 32>}, {pipeline_mode = #tpu.pipeline_mode<synchronous>, transform_indices = @transform_1, window_bounds = array<i64: 16, 32>}, {pipeline_mode = #tpu.pipeline_mode<synchronous>, transform_indices = @transform_2, window_bounds = array<i64: 1, 32>}, {transform_indices = @transform_3, window_bounds = array<i64: 8, 32>}]} {
    %c0 = arith.constant 0 : index
    %c0_0 = arith.constant 0 : index
    %0 = vector.load %arg2[%c0, %c0_0] : memref<16x32xf32, #tpu.memory_space<vmem>>, vector<16x32xf32>
    %c0_1 = arith.constant 0 : index
    %c0_2 = arith.constant 0 : index
    %1 = vector.load %arg1[%c0_1, %c0_2] : memref<8x32xf32, #tpu.memory_space<vmem>>, vector<8x32xf32>
    %cst = arith.constant dense<0.000000e+00> : vector<8x16xf32>
    %2 = tpu.matmul %1, %0, %cst {dimension_numbers = #tpu.dot_dimension_numbers<[1], [1], [0], [0], [0, 0, 1, 0], [], []>} : vector<8x32xf32>, vector<16x32xf32>, vector<8x16xf32> -> vector<8x16xf32>
    %cst_3 = arith.constant dense<0.000000e+00> : vector<8x32xf32>
    %3 = tpu.matmul %2, %0, %cst_3 {dimension_numbers = #tpu.dot_dimension_numbers<[1], [0], [0], [1], [0, 0, 1, 1], [], []>} : vector<8x16xf32>, vector<16x32xf32>, vector<8x32xf32> -> vector<8x32xf32>
    %c0_4 = arith.constant 0 : index
    %c0_5 = arith.constant 0 : index
    %4 = vector.load %arg3[%c0_4, %c0_5] : memref<1x32xf32, #tpu.memory_space<vmem>>, vector<1x32xf32>
    %5 = vector.broadcast %4 : vector<1x32xf32> to vector<8x32xf32>
    %6 = arith.addf %3, %5 : vector<8x32xf32>
    %cst_6 = arith.constant 0.000000e+00 : f32
    %7 = vector.broadcast %cst_6 : f32 to vector<8x32xf32>
    %8 = arith.maximumf %6, %7 : vector<8x32xf32>
    %c0_7 = arith.constant 0 : index
    %c0_8 = arith.constant 0 : index
    %9 = vector.load %arg4[%c0_7, %c0_8] : memref<8x32xf32, #tpu.memory_space<vmem>>, vector<8x32xf32>
    tpu.vector_store %arg4[%c0_7, %c0_8], %8 {strides = array<i32>} : memref<8x32xf32, #tpu.memory_space<vmem>>, vector<8x32xf32>,
    return
  }
  func.func @transform_0(%arg0: i32) -> (i32, i32) {
    %c0_i32 = arith.constant 0 : i32
    %c0_i32_0 = arith.constant 0 : i32
    return %arg0, %c0_i32 : i32, i32
  }
  func.func @transform_1(%arg0: i32) -> (i32, i32) {
    %c0_i32 = arith.constant 0 : i32
    %c0_i32_0 = arith.constant 0 : i32
    %c0_i32_1 = arith.constant 0 : i32
    return %c0_i32, %c0_i32_0 : i32, i32
  }
  func.func @transform_2(%arg0: i32) -> (i32, i32) {
    %c0_i32 = arith.constant 0 : i32
    %c0_i32_0 = arith.constant 0 : i32
    %c0_i32_1 = arith.constant 0 : i32
    return %c0_i32, %c0_i32_0 : i32, i32
  }
  func.func @transform_3(%arg0: i32) -> (i32, i32) {
    %c0_i32 = arith.constant 0 : i32
    %c0_i32_0 = arith.constant 0 : i32
    return %arg0, %c0_i32 : i32, i32
  }
}

</mosaic_0001>

<llo_original>
// kernel: tpu_custom_call.1
$region0: #{tpu_custom_call.1}
  #allocation0 [shape = 'u32[]', space=smem, size = 0x4, offset = 0x4, fixed_abs, tag = 'smem constant byte address 0x4 - core index']
  #allocation1 [shape = 'u32[144,128]{1,0:T(1,128)}', space=vmem, size = 0x12000, scoped, tag = 'internal scratch']
  %s0 = inlined_call_operand.hbm [shape: f32[8,32], index: 0, kind: input, shape index: {}]
  %s1 = inlined_call_operand.hbm [shape: f32[16,32], index: 1, kind: input, shape index: {}]
  %s2 = inlined_call_operand.vmem [shape: f32[1,32], index: 2, kind: input, shape index: {}]
  %s3 = inlined_call_operand.hbm [shape: f32[8,32], index: 3, kind: output, shape index: {}]
  %s4 = sld [smem:[#allocation0]]
  $region30: #{tpu_custom_call.1} parent=0
    _
  %s6 = ssub.s32 1, %s4
  %s7 = scalar_select 0, %s6, %s4
  $region1: #{tpu_custom_call.1} parent=0
    #allocation2 [shape = 'u8[4096]{0}', space=vmem, size = 0x1000, scoped, tag = 'input window, operand 0, single buffered']
    #allocation3 [shape = 's32[1]{0}', space=sflag, size = 0x4, scoped, tag = 'scoped memory for tpu_custom_call.1']
    #allocation4 [shape = 's32[1]{0}', space=sflag, size = 0x4, scoped, tag = 'scoped memory for tpu_custom_call.1']
    #allocation5 [shape = 'u8[8192]{0}', space=vmem, size = 0x2000, scoped, tag = 'input window, operand 1, single buffered']
    #allocation6 [shape = 's32[1]{0}', space=sflag, size = 0x4, scoped, tag = 'scoped memory for tpu_custom_call.1']
    #allocation7 [shape = 'u8[4096]{0}', space=vmem, size = 0x1000, scoped, tag = 'output window, operand 0, single buffered']
    %8 = vsyncpa [#allocation3], 0
    %9 = vsyncpa [#allocation6], 0
    %10 = vsyncpa [#allocation4], 0
    // Predicated region
    $region2: #{tpu_custom_call.1} parent=1 // pred_check
      _
    $region3: #{tpu_custom_call.1} parent=1 // pred_check_branch
      %12 = sbr.rel (0) target = $region5
    $region4: #{tpu_custom_call.1} parent=1 // pred_region
      %s14 = ssub.s32 128, 128
      %15 = vsyncadd [#allocation3], %s14
      %s17 = sshll.u32 [#allocation2], 4
      %s18 = int_to_ptr.vmem [resolvable:$true] %s17
      %20 = dma.hbm_to_vmem [thread:$0]  %s0, 128, %s18, [#allocation3]
    $region5: #{tpu_custom_call.1} parent=1 // pred_fallthru
      _
    // Predicated region
    $region6: #{tpu_custom_call.1} parent=1 // pred_check
      _
    $region7: #{tpu_custom_call.1} parent=1 // pred_check_branch
      %22 = sbr.rel (0) target = $region9
    $region8: #{tpu_custom_call.1} parent=1 // pred_region
      %s24 = ssub.s32 256, 256
      %25 = vsyncadd [#allocation6], %s24
      %s26 = sshll.u32 [#allocation5], 4
      %s27 = int_to_ptr.vmem [resolvable:$true] %s26
      %32 = dma.hbm_to_vmem [thread:$0]  %s1, 256, %s27, [#allocation6], 128, 128, 8
    $region9: #{tpu_custom_call.1} parent=1 // pred_fallthru
      _
    // Predicated region
    $region10: #{tpu_custom_call.1} parent=1 // pred_check
      _
    $region11: #{tpu_custom_call.1} parent=1 // pred_check_branch
      %34 = sbr.rel (0) target = $region13
    $region12: #{tpu_custom_call.1} parent=1 // pred_region
      _
    $region13: #{tpu_custom_call.1} parent=1 // pred_fallthru
      _
    // Predicated region
    $region14: #{tpu_custom_call.1} parent=1 // pred_check
      _
    $region15: #{tpu_custom_call.1} parent=1 // pred_check_branch
      %36 = sbr.rel (0) target = $region17
    $region16: #{tpu_custom_call.1} parent=1 // pred_region
      %37 = dma.done [#allocation3], 128
    $region17: #{tpu_custom_call.1} parent=1 // pred_fallthru
      _
    // Predicated region
    $region18: #{tpu_custom_call.1} parent=1 // pred_check
      _
    $region19: #{tpu_custom_call.1} parent=1 // pred_check_branch
      %39 = sbr.rel (0) target = $region21
    $region20: #{tpu_custom_call.1} parent=1 // pred_region
      %40 = dma.done [#allocation6], 256
    $region21: #{tpu_custom_call.1} parent=1 // pred_fallthru
      _
    %v41 = vld [vmem:[#allocation5] sm:$0xff]
    %v42 = vld [vmem:[#allocation5 + $0x8] sm:$0xff]
    %v43 = vld [vmem:[#allocation2] sm:$0xff]
    %vm44 = vcmask 261120
    %v46 = vsel %vm44, %v43, 0
    %v49 = vsel %vm44, %v41, 0
    %v52 = vsel %vm44, %v42, 0
    %54 = vmatprep.subr.mxu0 0.0
    %55 = vmatpush1.xpose.msra.mxu0 %v49
    %56 = vmatprep.subr.mxu0 0.0
    %57 = vmatpush1.xpose.msra.mxu0 %v52
    %58 = vmatprep.subr.mxu0 0.0
    %59 = vmatpush1.xpose.msra.mxu0 0.0
    %60 = vmatprep.subr.mxu0 0.0
    %61 = vmatpush1.xpose.msra.mxu0 0.0
    %62 = vmatprep.subr.mxu0 0.0
    %63 = vmatpush1.xpose.msra.mxu0 0.0
    %64 = vmatprep.subr.mxu0 0.0
    %65 = vmatpush1.xpose.msra.mxu0 0.0
    %66 = vmatprep.subr.mxu0 0.0
    %67 = vmatpush1.xpose.msra.mxu0 0.0
    %68 = vmatprep.subr.mxu0 0.0
    %69 = vmatpush1.xpose.msra.mxu0 0.0
    %70 = vmatprep.subr.mxu0 0.0
    %71 = vmatpush1.xpose.msra.mxu0 0.0
    %72 = vmatprep.subr.mxu0 0.0
    %73 = vmatpush1.xpose.msra.mxu0 0.0
    %74 = vmatprep.subr.mxu0 0.0
    %75 = vmatpush1.xpose.msra.mxu0 0.0
    %76 = vmatprep.subr.mxu0 0.0
    %77 = vmatpush1.xpose.msra.mxu0 0.0
    %78 = vmatprep.subr.mxu0 0.0
    %79 = vmatpush1.xpose.msra.mxu0 0.0
    %80 = vmatprep.subr.mxu0 0.0
    %81 = vmatpush1.xpose.msra.mxu0 0.0
    %82 = vmatprep.subr.mxu0 0.0
    %83 = vmatpush1.xpose.msra.mxu0 0.0
    %84 = vmatprep.subr.mxu0 0.0
    %85 = vmatpush1.xpose.msra.mxu0 0.0
    %86 = vmatprep.subr.mxu0 0.0
    %87 = vmatpush1.xpose.msra.mxu0 0.0
    %88 = vmatprep.subr.mxu0 0.0
    %89 = vmatpush1.xpose.msra.mxu0 0.0
    %90 = vmatprep.subr.mxu0 0.0
    %91 = vmatpush1.xpose.msra.mxu0 0.0
    %92 = vmatprep.subr.mxu0 0.0
    %93 = vmatpush1.xpose.msra.mxu0 0.0
    %94 = vmatprep.subr.mxu0 0.0
    %95 = vmatpush1.xpose.msra.mxu0 0.0
    %96 = vmatprep.subr.mxu0 0.0
    %97 = vmatpush1.xpose.msra.mxu0 0.0
    %98 = vmatprep.subr.mxu0 0.0
    %99 = vmatpush1.xpose.msra.mxu0 0.0
    %100 = vmatprep.subr.mxu0 0.0
    %101 = vmatpush1.xpose.msra.mxu0 0.0
    %102 = vmatprep.subr.mxu0 0.0
    %103 = vmatpush1.xpose.msra.mxu0 0.0
    %104 = vmatprep.subr.mxu0 0.0
    %105 = vmatpush1.xpose.msra.mxu0 0.0
    %106 = vmatprep.subr.mxu0 0.0
    %107 = vmatpush1.xpose.msra.mxu0 0.0
    %108 = vmatprep.subr.mxu0 0.0
    %109 = vmatpush1.xpose.msra.mxu0 0.0
    %110 = vmatprep.subr.mxu0 0.0
    %111 = vmatpush1.xpose.msra.mxu0 0.0
    %112 = vmatprep.subr.mxu0 0.0
    %113 = vmatpush1.xpose.msra.mxu0 0.0
    %114 = vmatprep.subr.mxu0 0.0
    %115 = vmatpush1.xpose.msra.mxu0 0.0
    %116 = vmatprep.subr.mxu0 0.0
    %117 = vmatpush1.xpose.msra.mxu0 0.0
    %118 = vmatprep.mubr.f32.mxu0 0.0
    %119 = vmatmul.mubr.f32.gmra.mrb[0].mxu0 %v46
    %v120 = vpop.f32.mrb[0].mxu0
    %v121 = vadd.f32 0.0, %v120
    %v122 = vpop.f32.mrb[0].mxu0
    %123 = vdwg.mxu0
    %v124 = vld [vmem:[%s2] sm:$0x1]
    %v126 = vlaneseq
    %v127 = vshrl.u32 %v126, 7
    %v128 = vsub.s32 0, %v127
    %v129 = vrot.slane %v124, %v128
    %vm131 = vcmask 130048
    %v133 = vsel %vm131, %v121, 0
    %135 = vmatprep.subr.mxu0 0.0
    %136 = vmatpush1.msra.mxu0 %v41
    %137 = vmatprep.subr.mxu0 0.0
    %138 = vmatpush1.msra.mxu0 %v42
    %139 = vmatprep.subr.mxu0 0.0
    %140 = vmatpush1.msra.mxu0 0.0
    %141 = vmatprep.subr.mxu0 0.0
    %142 = vmatpush1.msra.mxu0 0.0
    %143 = vmatprep.subr.mxu0 0.0
    %144 = vmatpush1.msra.mxu0 0.0
    %145 = vmatprep.subr.mxu0 0.0
    %146 = vmatpush1.msra.mxu0 0.0
    %147 = vmatprep.subr.mxu0 0.0
    %148 = vmatpush1.msra.mxu0 0.0
    %149 = vmatprep.subr.mxu0 0.0
    %150 = vmatpush1.msra.mxu0 0.0
    %151 = vmatprep.subr.mxu0 0.0
    %152 = vmatpush1.msra.mxu0 0.0
    %153 = vmatprep.subr.mxu0 0.0
    %154 = vmatpush1.msra.mxu0 0.0
    %155 = vmatprep.subr.mxu0 0.0
    %156 = vmatpush1.msra.mxu0 0.0
    %157 = vmatprep.subr.mxu0 0.0
    %158 = vmatpush1.msra.mxu0 0.0
    %159 = vmatprep.subr.mxu0 0.0
    %160 = vmatpush1.msra.mxu0 0.0
    %161 = vmatprep.subr.mxu0 0.0
    %162 = vmatpush1.msra.mxu0 0.0
    %163 = vmatprep.subr.mxu0 0.0
    %164 = vmatpush1.msra.mxu0 0.0
    %165 = vmatprep.subr.mxu0 0.0
    %166 = vmatpush1.msra.mxu0 0.0
    %167 = vmatprep.subr.mxu0 0.0
    %168 = vmatpush1.msra.mxu0 0.0
    %169 = vmatprep.subr.mxu0 0.0
    %170 = vmatpush1.msra.mxu0 0.0
    %171 = vmatprep.subr.mxu0 0.0
    %172 = vmatpush1.msra.mxu0 0.0
    %173 = vmatprep.subr.mxu0 0.0
    %174 = vmatpush1.msra.mxu0 0.0
    %175 = vmatprep.subr.mxu0 0.0
    %176 = vmatpush1.msra.mxu0 0.0
    %177 = vmatprep.subr.mxu0 0.0
    %178 = vmatpush1.msra.mxu0 0.0
    %179 = vmatprep.subr.mxu0 0.0
    %180 = vmatpush1.msra.mxu0 0.0
    %181 = vmatprep.subr.mxu0 0.0
    %182 = vmatpush1.msra.mxu0 0.0
    %183 = vmatprep.subr.mxu0 0.0
    %184 = vmatpush1.msra.mxu0 0.0
    %185 = vmatprep.subr.mxu0 0.0
    %186 = vmatpush1.msra.mxu0 0.0
    %187 = vmatprep.subr.mxu0 0.0
    %188 = vmatpush1.msra.mxu0 0.0
    %189 = vmatprep.subr.mxu0 0.0
    %190 = vmatpush1.msra.mxu0 0.0
    %191 = vmatprep.subr.mxu0 0.0
    %192 = vmatpush1.msra.mxu0 0.0
    %193 = vmatprep.subr.mxu0 0.0
    %194 = vmatpush1.msra.mxu0 0.0
    %195 = vmatprep.subr.mxu0 0.0
    %196 = vmatpush1.msra.mxu0 0.0
    %197 = vmatprep.subr.mxu0 0.0
    %198 = vmatpush1.msra.mxu0 0.0
    %199 = vmatprep.mubr.f32.mxu0 0.0
    %200 = vmatmul.mubr.f32.gmra.mrb[0].mxu0 %v133
    %v201 = vpop.f32.mrb[0].mxu0
    %v202 = vadd.f32 %v129, %v201
    %v203 = vpop.f32.mrb[0].mxu0
    %204 = vdwg.mxu0
    %v205 = vmax.f32 %v202, 0.0
    %206 = vst.msk [vmem:[#allocation7] sm:$0xff] %vm44, %v205
    // Predicated region
    $region22: #{tpu_custom_call.1} parent=1 // pred_check
      _
    $region23: #{tpu_custom_call.1} parent=1 // pred_check_branch
      %208 = sbr.rel (0) target = $region25
    $region24: #{tpu_custom_call.1} parent=1 // pred_region
      %s210 = ssub.s32 128, 128
      %211 = vsyncadd [#allocation4], %s210
      %s213 = sshll.u32 [#allocation7], 4
      %s214 = int_to_ptr.vmem [resolvable:$true] %s213
      %216 = dma.vmem_to_hbm [thread:$0]  %s214, 128, %s3, [#allocation4]
    $region25: #{tpu_custom_call.1} parent=1 // pred_fallthru
      _
    // Predicated region
    $region26: #{tpu_custom_call.1} parent=1 // pred_check
      _
    $region27: #{tpu_custom_call.1} parent=1 // pred_check_branch
      %218 = sbr.rel (0) target = $region29
    $region28: #{tpu_custom_call.1} parent=1 // pred_region
      %219 = dma.done [#allocation4], 128
    $region29: #{tpu_custom_call.1} parent=1 // pred_fallthru
      _
    %220 = vsyncpa [#allocation3], 1
    %221 = vsyncpa [#allocation6], 1
    %222 = vsyncpa [#allocation4], 1

// kernel: tpu_custom_call.1
$region0: #{tpu_custom_call.1}
  #allocation0 [shape = 'u32[]', space=smem, size = 0x4, offset = 0x4, fixed_abs, tag = 'smem constant byte address 0x4 - core index']
  #allocation1 [shape = 'u32[144,128]{1,0:T(1,128)}', space=vmem, size = 0x12000, scoped, tag = 'internal scratch']
  %s0 = inlined_call_operand.hbm [shape: f32[8,32], index: 0, kind: input, shape index: {}]
  %s1 = inlined_call_operand.hbm [shape: f32[16,32], index: 1, kind: input, shape index: {}]
  %s2 = inlined_call_operand.vmem [shape: f32[1,32], index: 2, kind: input, shape index: {}]
  %s3 = inlined_call_operand.hbm [shape: f32[8,32], index: 3, kind: output, shape index: {}]
  %s4 = sld [smem:[#allocation0]]
  $region30: #{tpu_custom_call.1} parent=0
    _
  %s6 = ssub.s32 1, %s4
  %s7 = scalar_select 0, %s6, %s4
  $region1: #{tpu_custom_call.1} parent=0
    #allocation2 [shape = 'u8[4096]{0}', space=vmem, size = 0x1000, scoped, tag = 'input window, operand 0, single buffered']
    #allocation3 [shape = 's32[1]{0}', space=sflag, size = 0x4, scoped, tag = 'scoped memory for tpu_custom_call.1']
    #allocation4 [shape = 's32[1]{0}', space=sflag, size = 0x4, scoped, tag = 'scoped memory for tpu_custom_call.1']
    #allocation5 [shape = 'u8[8192]{0}', space=vmem, size = 0x2000, scoped, tag = 'input window, operand 1, single buffered']
    #allocation6 [shape = 's32[1]{0}', space=sflag, size = 0x4, scoped, tag = 'scoped memory for tpu_custom_call.1']
    #allocation7 [shape = 'u8[4096]{0}', space=vmem, size = 0x1000, scoped, tag = 'output window, operand 0, single buffered']
    %8 = vsyncpa [#allocation3], 0
    %9 = vsyncpa [#allocation6], 0
    %10 = vsyncpa [#allocation4], 0
    // Predicated region
    $region2: #{tpu_custom_call.1} parent=1 // pred_check
      _
    $region3: #{tpu_custom_call.1} parent=1 // pred_check_branch
      %12 = sbr.rel (0) target = $region5
    $region4: #{tpu_custom_call.1} parent=1 // pred_region
      %s14 = ssub.s32 128, 128
      %15 = vsyncadd [#allocation3], %s14
      %s17 = sshll.u32 [#allocation2], 4
      %s18 = int_to_ptr.vmem [resolvable:$true] %s17
      %20 = dma.hbm_to_vmem [thread:$0]  %s0, 128, %s18, [#allocation3]
    $region5: #{tpu_custom_call.1} parent=1 // pred_fallthru
      _
    // Predicated region
    $region6: #{tpu_custom_call.1} parent=1 // pred_check
      _
    $region7: #{tpu_custom_call.1} parent=1 // pred_check_branch
      %22 = sbr.rel (0) target = $region9
    $region8: #{tpu_custom_call.1} parent=1 // pred_region
      %s24 = ssub.s32 256, 256
      %25 = vsyncadd [#allocation6], %s24
      %s26 = sshll.u32 [#allocation5], 4
      %s27 = int_to_ptr.vmem [resolvable:$true] %s26
      %32 = dma.hbm_to_vmem [thread:$0]  %s1, 256, %s27, [#allocation6], 128, 128, 8
    $region9: #{tpu_custom_call.1} parent=1 // pred_fallthru
      _
    // Predicated region
    $region10: #{tpu_custom_call.1} parent=1 // pred_check
      _
    $region11: #{tpu_custom_call.1} parent=1 // pred_check_branch
      %34 = sbr.rel (0) target = $region13
    $region12: #{tpu_custom_call.1} parent=1 // pred_region
      _
    $region13: #{tpu_custom_call.1} parent=1 // pred_fallthru
      _
    // Predicated region
    $region14: #{tpu_custom_call.1} parent=1 // pred_check
      _
    $region15: #{tpu_custom_call.1} parent=1 // pred_check_branch
      %36 = sbr.rel (0) target = $region17
    $region16: #{tpu_custom_call.1} parent=1 // pred_region
      %37 = dma.done [#allocation3], 128
    $region17: #{tpu_custom_call.1} parent=1 // pred_fallthru
      _
    // Predicated region
    $region18: #{tpu_custom_call.1} parent=1 // pred_check
      _
    $region19: #{tpu_custom_call.1} parent=1 // pred_check_branch
      %39 = sbr.rel (0) target = $region21
    $region20: #{tpu_custom_call.1} parent=1 // pred_region
      %40 = dma.done [#allocation6], 256
    $region21: #{tpu_custom_call.1} parent=1 // pred_fallthru
      _
    %v41 = vld [vmem:[#allocation5] sm:$0xff]
    %v42 = vld [vmem:[#allocation5 + $0x8] sm:$0xff]
    %v43 = vld [vmem:[#allocation2] sm:$0xff]
    %vm44 = vcmask 261120
    %v46 = vsel %vm44, %v43, 0
    %v49 = vsel %vm44, %v41, 0
    %v52 = vsel %vm44, %v42, 0
    %54 = vmatprep.subr.mxu0 0.0
    %55 = vmatpush1.xpose.msra.mxu0 %v49
    %56 = vmatprep.subr.mxu0 0.0
    %57 = vmatpush1.xpose.msra.mxu0 %v52
    %58 = vmatprep.subr.mxu0 0.0
    %59 = vmatpush1.xpose.msra.mxu0 0.0
    %60 = vmatprep.subr.mxu0 0.0
    %61 = vmatpush1.xpose.msra.mxu0 0.0
    %62 = vmatprep.subr.mxu0 0.0
    %63 = vmatpush1.xpose.msra.mxu0 0.0
    %64 = vmatprep.subr.mxu0 0.0
    %65 = vmatpush1.xpose.msra.mxu0 0.0
    %66 = vmatprep.subr.mxu0 0.0
    %67 = vmatpush1.xpose.msra.mxu0 0.0
    %68 = vmatprep.subr.mxu0 0.0
    %69 = vmatpush1.xpose.msra.mxu0 0.0
    %70 = vmatprep.subr.mxu0 0.0
    %71 = vmatpush1.xpose.msra.mxu0 0.0
    %72 = vmatprep.subr.mxu0 0.0
    %73 = vmatpush1.xpose.msra.mxu0 0.0
    %74 = vmatprep.subr.mxu0 0.0
    %75 = vmatpush1.xpose.msra.mxu0 0.0
    %76 = vmatprep.subr.mxu0 0.0
    %77 = vmatpush1.xpose.msra.mxu0 0.0
    %78 = vmatprep.subr.mxu0 0.0
    %79 = vmatpush1.xpose.msra.mxu0 0.0
    %80 = vmatprep.subr.mxu0 0.0
    %81 = vmatpush1.xpose.msra.mxu0 0.0
    %82 = vmatprep.subr.mxu0 0.0
    %83 = vmatpush1.xpose.msra.mxu0 0.0
    %84 = vmatprep.subr.mxu0 0.0
    %85 = vmatpush1.xpose.msra.mxu0 0.0
    %86 = vmatprep.subr.mxu0 0.0
    %87 = vmatpush1.xpose.msra.mxu0 0.0
    %88 = vmatprep.subr.mxu0 0.0
    %89 = vmatpush1.xpose.msra.mxu0 0.0
    %90 = vmatprep.subr.mxu0 0.0
    %91 = vmatpush1.xpose.msra.mxu0 0.0
    %92 = vmatprep.subr.mxu0 0.0
    %93 = vmatpush1.xpose.msra.mxu0 0.0
    %94 = vmatprep.subr.mxu0 0.0
    %95 = vmatpush1.xpose.msra.mxu0 0.0
    %96 = vmatprep.subr.mxu0 0.0
    %97 = vmatpush1.xpose.msra.mxu0 0.0
    %98 = vmatprep.subr.mxu0 0.0
    %99 = vmatpush1.xpose.msra.mxu0 0.0
    %100 = vmatprep.subr.mxu0 0.0
    %101 = vmatpush1.xpose.msra.mxu0 0.0
    %102 = vmatprep.subr.mxu0 0.0
    %103 = vmatpush1.xpose.msra.mxu0 0.0
    %104 = vmatprep.subr.mxu0 0.0
    %105 = vmatpush1.xpose.msra.mxu0 0.0
    %106 = vmatprep.subr.mxu0 0.0
    %107 = vmatpush1.xpose.msra.mxu0 0.0
    %108 = vmatprep.subr.mxu0 0.0
    %109 = vmatpush1.xpose.msra.mxu0 0.0
    %110 = vmatprep.subr.mxu0 0.0
    %111 = vmatpush1.xpose.msra.mxu0 0.0
    %112 = vmatprep.subr.mxu0 0.0
    %113 = vmatpush1.xpose.msra.mxu0 0.0
    %114 = vmatprep.subr.mxu0 0.0
    %115 = vmatpush1.xpose.msra.mxu0 0.0
    %116 = vmatprep.subr.mxu0 0.0
    %117 = vmatpush1.xpose.msra.mxu0 0.0
    %118 = vmatprep.mubr.f32.mxu0 0.0
    %119 = vmatmul.mubr.f32.gmra.mrb[0].mxu0 %v46
    %v120 = vpop.f32.mrb[0].mxu0
    %v121 = vadd.f32 0.0, %v120
    %v122 = vpop.f32.mrb[0].mxu0
    %123 = vdwg.mxu0
    %v124 = vld [vmem:[%s2] sm:$0x1]
    %v126 = vlaneseq
    %v127 = vshrl.u32 %v126, 7
    %v128 = vsub.s32 0, %v127
    %v129 = vrot.slane %v124, %v128
    %vm131 = vcmask 130048
    %v133 = vsel %vm131, %v121, 0
    %135 = vmatprep.subr.mxu0 0.0
    %136 = vmatpush1.msra.mxu0 %v41
    %137 = vmatprep.subr.mxu0 0.0
    %138 = vmatpush1.msra.mxu0 %v42
    %139 = vmatprep.subr.mxu0 0.0
    %140 = vmatpush1.msra.mxu0 0.0
    %141 = vmatprep.subr.mxu0 0.0
    %142 = vmatpush1.msra.mxu0 0.0
    %143 = vmatprep.subr.mxu0 0.0
    %144 = vmatpush1.msra.mxu0 0.0
    %145 = vmatprep.subr.mxu0 0.0
    %146 = vmatpush1.msra.mxu0 0.0
    %147 = vmatprep.subr.mxu0 0.0
    %148 = vmatpush1.msra.mxu0 0.0
    %149 = vmatprep.subr.mxu0 0.0
    %150 = vmatpush1.msra.mxu0 0.0
    %151 = vmatprep.subr.mxu0 0.0
    %152 = vmatpush1.msra.mxu0 0.0
    %153 = vmatprep.subr.mxu0 0.0
    %154 = vmatpush1.msra.mxu0 0.0
    %155 = vmatprep.subr.mxu0 0.0
    %156 = vmatpush1.msra.mxu0 0.0
    %157 = vmatprep.subr.mxu0 0.0
    %158 = vmatpush1.msra.mxu0 0.0
    %159 = vmatprep.subr.mxu0 0.0
    %160 = vmatpush1.msra.mxu0 0.0
    %161 = vmatprep.subr.mxu0 0.0
    %162 = vmatpush1.msra.mxu0 0.0
    %163 = vmatprep.subr.mxu0 0.0
    %164 = vmatpush1.msra.mxu0 0.0
    %165 = vmatprep.subr.mxu0 0.0
    %166 = vmatpush1.msra.mxu0 0.0
    %167 = vmatprep.subr.mxu0 0.0
    %168 = vmatpush1.msra.mxu0 0.0
    %169 = vmatprep.subr.mxu0 0.0
    %170 = vmatpush1.msra.mxu0 0.0
    %171 = vmatprep.subr.mxu0 0.0
    %172 = vmatpush1.msra.mxu0 0.0
    %173 = vmatprep.subr.mxu0 0.0
    %174 = vmatpush1.msra.mxu0 0.0
    %175 = vmatprep.subr.mxu0 0.0
    %176 = vmatpush1.msra.mxu0 0.0
    %177 = vmatprep.subr.mxu0 0.0
    %178 = vmatpush1.msra.mxu0 0.0
    %179 = vmatprep.subr.mxu0 0.0
    %180 = vmatpush1.msra.mxu0 0.0
    %181 = vmatprep.subr.mxu0 0.0
    %182 = vmatpush1.msra.mxu0 0.0
    %183 = vmatprep.subr.mxu0 0.0
    %184 = vmatpush1.msra.mxu0 0.0
    %185 = vmatprep.subr.mxu0 0.0
    %186 = vmatpush1.msra.mxu0 0.0
    %187 = vmatprep.subr.mxu0 0.0
    %188 = vmatpush1.msra.mxu0 0.0
    %189 = vmatprep.subr.mxu0 0.0
    %190 = vmatpush1.msra.mxu0 0.0
    %191 = vmatprep.subr.mxu0 0.0
    %192 = vmatpush1.msra.mxu0 0.0
    %193 = vmatprep.subr.mxu0 0.0
    %194 = vmatpush1.msra.mxu0 0.0
    %195 = vmatprep.subr.mxu0 0.0
    %196 = vmatpush1.msra.mxu0 0.0
    %197 = vmatprep.subr.mxu0 0.0
    %198 = vmatpush1.msra.mxu0 0.0
    %199 = vmatprep.mubr.f32.mxu0 0.0
    %200 = vmatmul.mubr.f32.gmra.mrb[0].mxu0 %v133
    %v201 = vpop.f32.mrb[0].mxu0
    %v202 = vadd.f32 %v129, %v201
    %v203 = vpop.f32.mrb[0].mxu0
    %204 = vdwg.mxu0
    %v205 = vmax.f32 %v202, 0.0
    %206 = vst.msk [vmem:[#allocation7] sm:$0xff] %vm44, %v205
    // Predicated region
    $region22: #{tpu_custom_call.1} parent=1 // pred_check
      _
    $region23: #{tpu_custom_call.1} parent=1 // pred_check_branch
      %208 = sbr.rel (0) target = $region25
    $region24: #{tpu_custom_call.1} parent=1 // pred_region
      %s210 = ssub.s32 128, 128
      %211 = vsyncadd [#allocation4], %s210
      %s213 = sshll.u32 [#allocation7], 4
      %s214 = int_to_ptr.vmem [resolvable:$true] %s213
      %216 = dma.vmem_to_hbm [thread:$0]  %s214, 128, %s3, [#allocation4]
    $region25: #{tpu_custom_call.1} parent=1 // pred_fallthru
      _
    // Predicated region
    $region26: #{tpu_custom_call.1} parent=1 // pred_check
      _
    $region27: #{tpu_custom_call.1} parent=1 // pred_check_branch
      %218 = sbr.rel (0) target = $region29
    $region28: #{tpu_custom_call.1} parent=1 // pred_region
      %219 = dma.done [#allocation4], 128
    $region29: #{tpu_custom_call.1} parent=1 // pred_fallthru
      _
    %220 = vsyncpa [#allocation3], 1
    %221 = vsyncpa [#allocation6], 1
    %222 = vsyncpa [#allocation4], 1

</llo_original>
